<compile_context>
chip_gen: v6e
topology: v6e:2x2x1
jax: 0.10.0
libtpu: 0.0.40
codegen_flags: <defaults>
</compile_context>

<pallas_src>
import functools

import jax
import jax.numpy as jnp
from jax.experimental import pallas as pl
from jax.experimental.pallas import tpu as pltpu

_LANE = 128
_SUB = 8


def _loss_partials_kernel(pm_ref, pe_ref, tm_ref, te_ref, acc_ref, *, sub):
    """Accumulates per-image, per-lane partial statistics.

    acc_ref (output-resident accumulator), kernel view shape (7, sub, 128):
      [0] sum(pm*tm)  [1] sum(pm)  [2] sum(tm)
      [3] sum(pe*te)  [4] sum(pe)  [5] sum(te)
      [6] running max(pm)
    """
    k = pl.program_id(1)

    @pl.when(k == 0)
    def _init():
        acc_ref[...] = jnp.zeros_like(acc_ref)
        acc_ref[6] = jnp.full(acc_ref.shape[1:], -jnp.inf, acc_ref.dtype)

    pm = pm_ref[...].astype(jnp.float32)   # (rows_tile, 128)
    pe = pe_ref[...].astype(jnp.float32)
    tm = tm_ref[...].astype(jnp.float32)
    te = te_ref[...].astype(jnp.float32)

    rows = pm.shape[0]
    groups = rows // sub

    def fold_sum(x):   # (rows,128) -> (sub,128): vreg-wise VPU adds only
        return jnp.sum(x.reshape(groups, sub, _LANE), axis=0)

    def fold_max(x):
        return jnp.max(x.reshape(groups, sub, _LANE), axis=0)

    acc_ref[0] += fold_sum(pm * tm)
    acc_ref[1] += fold_sum(pm)
    acc_ref[2] += fold_sum(tm)
    acc_ref[3] += fold_sum(pe * te)
    acc_ref[4] += fold_sum(pe)
    acc_ref[5] += fold_sum(te)
    acc_ref[6] = jnp.maximum(acc_ref[6], fold_max(pm))


def _pick_rows_tile(rows):
    for cand in (512, 256, 128, 64, 32, 16, 8):
        if rows % cand == 0:
            return cand
    return rows  # full-extent block (valid; rows is padded to a multiple of 8)


def loss_builder_forward(pred_mask, pred_edge, tgt_mask, tgt_edge, tgt_label,
                         eps=1e-6, mask_scale=0.16, edge_scale=0.8,
                         cls_scale=0.04):
    """JAX/Pallas equivalent of LossBuilder.forward.

    pred_mask, pred_edge, tgt_mask, tgt_edge: (N, 1, H, W) (any float dtype)
    tgt_label: (N,)
    Returns (loss, metrics) with metrics = {cls_loss, edge_loss, mask_loss}.
    """
    N = pred_mask.shape[0]
    hw = 1
    for d in pred_mask.shape[1:]:
        hw *= int(d)

    chunk = _LANE * _SUB
    hw_pad = ((hw + chunk - 1) // chunk) * chunk
    rows = hw_pad // _LANE
    rows_tile = _pick_rows_tile(rows)

    def prep(x):
        x = x.reshape(N, hw)
        if hw_pad != hw:
            # Zero padding is exact for all the sums; for max(pred_mask) it
            # assumes predictions are probabilities in [0,1] (required by the
            # image-level BCE term anyway).
            x = jnp.pad(x, ((0, 0), (0, hw_pad - hw)))
        return x.reshape(N, rows, _LANE)

    pm = prep(pred_mask)
    pe = prep(pred_edge)
    tm = prep(tgt_mask)
    te = prep(tgt_edge)

    in_spec = pl.BlockSpec((pl.Squeezed(), rows_tile, _LANE),
                           lambda n, k: (n, k, 0))
    out_spec = pl.BlockSpec((pl.Squeezed(), 7, _SUB, _LANE),
                            lambda n, k: (n, 0, 0, 0))

    acc = pl.pallas_call(
        functools.partial(_loss_partials_kernel, sub=_SUB),
        out_shape=jax.ShapeDtypeStruct((N, 7, _SUB, _LANE), jnp.float32),
        grid=(N, rows // rows_tile),
        in_specs=[in_spec] * 4,
        out_specs=out_spec,
        compiler_params=pltpu.CompilerParams(
            dimension_semantics=("parallel", "arbitrary")),
    )(pm, pe, tm, te)

    # ---- tiny epilogue (cross-lane reductions + loss math) on (N,7,8,128) ---
    sums = jnp.sum(acc[:, :6], axis=(2, 3))                      # (N, 6)
    inter_m, sum_pm, sum_tm = sums[:, 0], sums[:, 1], sums[:, 2]
    inter_e, sum_pe, sum_te = sums[:, 3], sums[:, 4], sums[:, 5]
    pred_label = jnp.max(acc[:, 6], axis=(1, 2))                 # (N,)

    # TODO(synk): exact BinaryDiceLoss internals (smooth / p-power / reduction)
    # are not visible in the reference repo; standard per-sample soft-dice with
    # eps smoothing and batch-mean reduction is implemented here.
    mask_loss = jnp.mean(1.0 - 2.0 * inter_m / (sum_pm + sum_tm + eps))
    edge_loss = jnp.mean(1.0 - 2.0 * inter_e / (sum_pe + sum_te + eps))

    # Image-scale BCE; log clamped at -100 like F.binary_cross_entropy.
    t = tgt_label.reshape(N).astype(jnp.float32)
    log_p = jnp.maximum(jnp.log(pred_label), -100.0)
    log_1mp = jnp.maximum(jnp.log(1.0 - pred_label), -100.0)
    bce_loss = jnp.mean(-(t * log_p + (1.0 - t) * log_1mp))

    loss = cls_scale * bce_loss + edge_scale * edge_loss + mask_scale * mask_loss
    metrics = dict(cls_loss=bce_loss, edge_loss=edge_loss, mask_loss=mask_loss)
    return loss, metrics


def _reference(pred_mask, pred_edge, tgt_mask, tgt_edge, tgt_label,
               eps=1e-6, mask_scale=0.16, edge_scale=0.8, cls_scale=0.04):
    """Pure-jnp reference for correctness checking."""
    N = pred_mask.shape[0]
    pm = pred_mask.reshape(N, -1).astype(jnp.float32)
    pe = pred_edge.reshape(N, -1).astype(jnp.float32)
    tm = tgt_mask.reshape(N, -1).astype(jnp.float32)
    te = tgt_edge.reshape(N, -1).astype(jnp.float32)
    t = tgt_label.reshape(N).astype(jnp.float32)

    def dice(p, g):
        inter = jnp.sum(p * g, axis=1)
        return jnp.mean(1.0 - 2.0 * inter
                        / (jnp.sum(p, axis=1) + jnp.sum(g, axis=1) + eps))

    mask_loss = dice(pm, tm)
    edge_loss = dice(pe, te)
    plabel = jnp.max(pm, axis=1)
    bce = -(t * jnp.maximum(jnp.log(plabel), -100.0)
            + (1.0 - t) * jnp.maximum(jnp.log(1.0 - plabel), -100.0))
    bce_loss = jnp.mean(bce)
    loss = cls_scale * bce_loss + edge_scale * edge_loss + mask_scale * mask_loss
    return loss, dict(cls_loss=bce_loss, edge_loss=edge_loss, mask_loss=mask_loss)


if __name__ == "__main__":
    key = jax.random.PRNGKey(0)
    k1, k2, k3, k4, k5 = jax.random.split(key, 5)

    N, C, H, W = 2, 1, 16, 16  # (N,1,H,W) as the module's docstring implies

    # Predictions are probabilities in (0,1) (sigmoid outputs), kept in bf16.
    pred_mask = jax.nn.sigmoid(jax.random.normal(k1, (N, C, H, W))).astype(jnp.bfloat16)
    pred_edge = jax.nn.sigmoid(jax.random.normal(k2, (N, C, H, W))).astype(jnp.bfloat16)
    # Targets are binary maps / labels (exact in bf16).
    tgt_mask = (jax.random.uniform(k3, (N, C, H, W)) > 0.5).astype(jnp.bfloat16)
    tgt_edge = (jax.random.uniform(k4, (N, C, H, W)) > 0.5).astype(jnp.bfloat16)
    tgt_label = (jax.random.uniform(k5, (N,)) > 0.5).astype(jnp.float32)

    pred = {"mask": pred_mask, "edge": pred_edge}
    batch = {"mask": tgt_mask, "edge": tgt_edge, "label": tgt_label}

    loss, metrics = loss_builder_forward(
        pred["mask"], pred["edge"], batch["mask"], batch["edge"], batch["label"]
    )
    jax.block_until_ready(loss)
    for v in metrics.values():
        jax.block_until_ready(v)

    ref_loss, ref_metrics = _reference(
        pred["mask"], pred["edge"], batch["mask"], batch["edge"], batch["label"]
    )
    assert abs(float(loss) - float(ref_loss)) < 1e-3, (float(loss), float(ref_loss))
    for name in metrics:
        assert abs(float(metrics[name]) - float(ref_metrics[name])) < 1e-3, name

    print("KERNEL_OK")
</pallas_src>

<mosaic_0001>
module attributes {stable_mosaic.version = 11 : i64} {
  func.func @_loss_partials_kernel(%arg0: i32, %arg1: i32, %arg2: memref<1x8x128xbf16, #tpu.memory_space<vmem>>, %arg3: memref<1x8x128xbf16, #tpu.memory_space<vmem>>, %arg4: memref<1x8x128xbf16, #tpu.memory_space<vmem>>, %arg5: memref<1x8x128xbf16, #tpu.memory_space<vmem>>, %arg6: memref<1x7x8x128xf32, #tpu.memory_space<vmem>>) attributes {dimension_semantics = [#tpu.dimension_semantics<parallel>, #tpu.dimension_semantics<arbitrary>], iteration_bounds = array<i64: 2, 1>, scalar_prefetch = 0 : i64, scratch_operands = 0 : i64, tpu.core_type = #tpu.core_type<tc>, window_params = [{transform_indices = @transform_0, window_bounds = array<i64: 1, 8, 128>}, {transform_indices = @transform_1, window_bounds = array<i64: 1, 8, 128>}, {transform_indices = @transform_2, window_bounds = array<i64: 1, 8, 128>}, {transform_indices = @transform_3, window_bounds = array<i64: 1, 8, 128>}, {transform_indices = @transform_4, window_bounds = array<i64: 1, 7, 8, 128>}]} {
    %c0_i32 = arith.constant 0 : i32
    %0 = arith.cmpi eq, %arg1, %c0_i32 : i32
    %1 = arith.extui %0 : i1 to i32
    %c0_i32_0 = arith.constant 0 : i32
    %2 = arith.cmpi ne, %1, %c0_i32_0 : i32
    scf.if %2 {
      %cst_68 = arith.constant 0.000000e+00 : f32
      %73 = vector.broadcast %cst_68 : f32 to vector<7x8x128xf32>
      %c0_69 = arith.constant 0 : index
      %c0_70 = arith.constant 0 : index
      %c0_71 = arith.constant 0 : index
      %c0_72 = arith.constant 0 : index
      %74 = vector.load %arg6[%c0_69, %c0_70, %c0_71, %c0_72] : memref<1x7x8x128xf32, #tpu.memory_space<vmem>>, vector<1x7x8x128xf32>
      %75 = vector.shape_cast %74 : vector<1x7x8x128xf32> to vector<7x8x128xf32>
      %76 = vector.shape_cast %73 : vector<7x8x128xf32> to vector<1x7x8x128xf32>
      tpu.vector_store %arg6[%c0_69, %c0_70, %c0_71, %c0_72], %76 {strides = array<i32>} : memref<1x7x8x128xf32, #tpu.memory_space<vmem>>, vector<1x7x8x128xf32>,
      %cst_73 = arith.constant 0xFF800000 : f32
      %77 = vector.broadcast %cst_73 : f32 to vector<8x128xf32>
      %c0_74 = arith.constant 0 : index
      %c6_75 = arith.constant 6 : index
      %c0_76 = arith.constant 0 : index
      %c0_77 = arith.constant 0 : index
      %78 = vector.load %arg6[%c0_74, %c6_75, %c0_76, %c0_77] : memref<1x7x8x128xf32, #tpu.memory_space<vmem>>, vector<1x1x8x128xf32>
      %79 = vector.shape_cast %78 : vector<1x1x8x128xf32> to vector<8x128xf32>
      %80 = vector.shape_cast %77 : vector<8x128xf32> to vector<1x1x8x128xf32>
      tpu.vector_store %arg6[%c0_74, %c6_75, %c0_76, %c0_77], %80 {strides = array<i32>} : memref<1x7x8x128xf32, #tpu.memory_space<vmem>>, vector<1x1x8x128xf32>,
    } else {
    }
    %c0 = arith.constant 0 : index
    %c0_1 = arith.constant 0 : index
    %c0_2 = arith.constant 0 : index
    %3 = vector.load %arg2[%c0, %c0_1, %c0_2] : memref<1x8x128xbf16, #tpu.memory_space<vmem>>, vector<1x8x128xbf16>
    %4 = vector.shape_cast %3 : vector<1x8x128xbf16> to vector<8x128xbf16>
    %5 = arith.extf %4 : vector<8x128xbf16> to vector<8x128xf32>
    %c0_3 = arith.constant 0 : index
    %c0_4 = arith.constant 0 : index
    %c0_5 = arith.constant 0 : index
    %6 = vector.load %arg3[%c0_3, %c0_4, %c0_5] : memref<1x8x128xbf16, #tpu.memory_space<vmem>>, vector<1x8x128xbf16>
    %7 = vector.shape_cast %6 : vector<1x8x128xbf16> to vector<8x128xbf16>
    %8 = arith.extf %7 : vector<8x128xbf16> to vector<8x128xf32>
    %c0_6 = arith.constant 0 : index
    %c0_7 = arith.constant 0 : index
    %c0_8 = arith.constant 0 : index
    %9 = vector.load %arg4[%c0_6, %c0_7, %c0_8] : memref<1x8x128xbf16, #tpu.memory_space<vmem>>, vector<1x8x128xbf16>
    %10 = vector.shape_cast %9 : vector<1x8x128xbf16> to vector<8x128xbf16>
    %11 = arith.extf %10 : vector<8x128xbf16> to vector<8x128xf32>
    %c0_9 = arith.constant 0 : index
    %c0_10 = arith.constant 0 : index
    %c0_11 = arith.constant 0 : index
    %12 = vector.load %arg5[%c0_9, %c0_10, %c0_11] : memref<1x8x128xbf16, #tpu.memory_space<vmem>>, vector<1x8x128xbf16>
    %13 = vector.shape_cast %12 : vector<1x8x128xbf16> to vector<8x128xbf16>
    %14 = arith.extf %13 : vector<8x128xbf16> to vector<8x128xf32>
    %c0_12 = arith.constant 0 : index
    %c0_13 = arith.constant 0 : index
    %c0_14 = arith.constant 0 : index
    %c0_15 = arith.constant 0 : index
    %15 = vector.load %arg6[%c0_12, %c0_13, %c0_14, %c0_15] : memref<1x7x8x128xf32, #tpu.memory_space<vmem>>, vector<1x1x8x128xf32>
    %16 = vector.shape_cast %15 : vector<1x1x8x128xf32> to vector<8x128xf32>
    %17 = arith.mulf %5, %11 : vector<8x128xf32>
    %18 = vector.shape_cast %17 : vector<8x128xf32> to vector<1x8x128xf32>
    %cst = arith.constant dense<0.000000e+00> : vector<8x128xf32>
    %19 = vector.multi_reduction <add>, %18, %cst [0] : vector<1x8x128xf32> to vector<8x128xf32>
    %20 = arith.addf %16, %19 : vector<8x128xf32>
    %c0_16 = arith.constant 0 : index
    %c0_17 = arith.constant 0 : index
    %c0_18 = arith.constant 0 : index
    %c0_19 = arith.constant 0 : index
    %21 = vector.load %arg6[%c0_16, %c0_17, %c0_18, %c0_19] : memref<1x7x8x128xf32, #tpu.memory_space<vmem>>, vector<1x1x8x128xf32>
    %22 = vector.shape_cast %21 : vector<1x1x8x128xf32> to vector<8x128xf32>
    %23 = vector.shape_cast %20 : vector<8x128xf32> to vector<1x1x8x128xf32>
    tpu.vector_store %arg6[%c0_16, %c0_17, %c0_18, %c0_19], %23 {strides = array<i32>} : memref<1x7x8x128xf32, #tpu.memory_space<vmem>>, vector<1x1x8x128xf32>,
    %c0_20 = arith.constant 0 : index
    %c1 = arith.constant 1 : index
    %c0_21 = arith.constant 0 : index
    %c0_22 = arith.constant 0 : index
    %24 = vector.load %arg6[%c0_20, %c1, %c0_21, %c0_22] : memref<1x7x8x128xf32, #tpu.memory_space<vmem>>, vector<1x1x8x128xf32>
    %25 = vector.shape_cast %24 : vector<1x1x8x128xf32> to vector<8x128xf32>
    %26 = vector.shape_cast %5 : vector<8x128xf32> to vector<1x8x128xf32>
    %cst_23 = arith.constant dense<0.000000e+00> : vector<8x128xf32>
    %27 = vector.multi_reduction <add>, %26, %cst_23 [0] : vector<1x8x128xf32> to vector<8x128xf32>
    %28 = arith.addf %25, %27 : vector<8x128xf32>
    %c0_24 = arith.constant 0 : index
    %c1_25 = arith.constant 1 : index
    %c0_26 = arith.constant 0 : index
    %c0_27 = arith.constant 0 : index
    %29 = vector.load %arg6[%c0_24, %c1_25, %c0_26, %c0_27] : memref<1x7x8x128xf32, #tpu.memory_space<vmem>>, vector<1x1x8x128xf32>
    %30 = vector.shape_cast %29 : vector<1x1x8x128xf32> to vector<8x128xf32>
    %31 = vector.shape_cast %28 : vector<8x128xf32> to vector<1x1x8x128xf32>
    tpu.vector_store %arg6[%c0_24, %c1_25, %c0_26, %c0_27], %31 {strides = array<i32>} : memref<1x7x8x128xf32, #tpu.memory_space<vmem>>, vector<1x1x8x128xf32>,
    %c0_28 = arith.constant 0 : index
    %c2 = arith.constant 2 : index
    %c0_29 = arith.constant 0 : index
    %c0_30 = arith.constant 0 : index
    %32 = vector.load %arg6[%c0_28, %c2, %c0_29, %c0_30] : memref<1x7x8x128xf32, #tpu.memory_space<vmem>>, vector<1x1x8x128xf32>
    %33 = vector.shape_cast %32 : vector<1x1x8x128xf32> to vector<8x128xf32>
    %34 = vector.shape_cast %11 : vector<8x128xf32> to vector<1x8x128xf32>
    %cst_31 = arith.constant dense<0.000000e+00> : vector<8x128xf32>
    %35 = vector.multi_reduction <add>, %34, %cst_31 [0] : vector<1x8x128xf32> to vector<8x128xf32>
    %36 = arith.addf %33, %35 : vector<8x128xf32>
    %c0_32 = arith.constant 0 : index
    %c2_33 = arith.constant 2 : index
    %c0_34 = arith.constant 0 : index
    %c0_35 = arith.constant 0 : index
    %37 = vector.load %arg6[%c0_32, %c2_33, %c0_34, %c0_35] : memref<1x7x8x128xf32, #tpu.memory_space<vmem>>, vector<1x1x8x128xf32>
    %38 = vector.shape_cast %37 : vector<1x1x8x128xf32> to vector<8x128xf32>
    %39 = vector.shape_cast %36 : vector<8x128xf32> to vector<1x1x8x128xf32>
    tpu.vector_store %arg6[%c0_32, %c2_33, %c0_34, %c0_35], %39 {strides = array<i32>} : memref<1x7x8x128xf32, #tpu.memory_space<vmem>>, vector<1x1x8x128xf32>,
    %c0_36 = arith.constant 0 : index
    %c3 = arith.constant 3 : index
    %c0_37 = arith.constant 0 : index
    %c0_38 = arith.constant 0 : index
    %40 = vector.load %arg6[%c0_36, %c3, %c0_37, %c0_38] : memref<1x7x8x128xf32, #tpu.memory_space<vmem>>, vector<1x1x8x128xf32>
    %41 = vector.shape_cast %40 : vector<1x1x8x128xf32> to vector<8x128xf32>
    %42 = arith.mulf %8, %14 : vector<8x128xf32>
    %43 = vector.shape_cast %42 : vector<8x128xf32> to vector<1x8x128xf32>
    %cst_39 = arith.constant dense<0.000000e+00> : vector<8x128xf32>
    %44 = vector.multi_reduction <add>, %43, %cst_39 [0] : vector<1x8x128xf32> to vector<8x128xf32>
    %45 = arith.addf %41, %44 : vector<8x128xf32>
    %c0_40 = arith.constant 0 : index
    %c3_41 = arith.constant 3 : index
    %c0_42 = arith.constant 0 : index
    %c0_43 = arith.constant 0 : index
    %46 = vector.load %arg6[%c0_40, %c3_41, %c0_42, %c0_43] : memref<1x7x8x128xf32, #tpu.memory_space<vmem>>, vector<1x1x8x128xf32>
    %47 = vector.shape_cast %46 : vector<1x1x8x128xf32> to vector<8x128xf32>
    %48 = vector.shape_cast %45 : vector<8x128xf32> to vector<1x1x8x128xf32>
    tpu.vector_store %arg6[%c0_40, %c3_41, %c0_42, %c0_43], %48 {strides = array<i32>} : memref<1x7x8x128xf32, #tpu.memory_space<vmem>>, vector<1x1x8x128xf32>,
    %c0_44 = arith.constant 0 : index
    %c4 = arith.constant 4 : index
    %c0_45 = arith.constant 0 : index
    %c0_46 = arith.constant 0 : index
    %49 = vector.load %arg6[%c0_44, %c4, %c0_45, %c0_46] : memref<1x7x8x128xf32, #tpu.memory_space<vmem>>, vector<1x1x8x128xf32>
    %50 = vector.shape_cast %49 : vector<1x1x8x128xf32> to vector<8x128xf32>
    %51 = vector.shape_cast %8 : vector<8x128xf32> to vector<1x8x128xf32>
    %cst_47 = arith.constant dense<0.000000e+00> : vector<8x128xf32>
    %52 = vector.multi_reduction <add>, %51, %cst_47 [0] : vector<1x8x128xf32> to vector<8x128xf32>
    %53 = arith.addf %50, %52 : vector<8x128xf32>
    %c0_48 = arith.constant 0 : index
    %c4_49 = arith.constant 4 : index
    %c0_50 = arith.constant 0 : index
    %c0_51 = arith.constant 0 : index
    %54 = vector.load %arg6[%c0_48, %c4_49, %c0_50, %c0_51] : memref<1x7x8x128xf32, #tpu.memory_space<vmem>>, vector<1x1x8x128xf32>
    %55 = vector.shape_cast %54 : vector<1x1x8x128xf32> to vector<8x128xf32>
    %56 = vector.shape_cast %53 : vector<8x128xf32> to vector<1x1x8x128xf32>
    tpu.vector_store %arg6[%c0_48, %c4_49, %c0_50, %c0_51], %56 {strides = array<i32>} : memref<1x7x8x128xf32, #tpu.memory_space<vmem>>, vector<1x1x8x128xf32>,
    %c0_52 = arith.constant 0 : index
    %c5 = arith.constant 5 : index
    %c0_53 = arith.constant 0 : index
    %c0_54 = arith.constant 0 : index
    %57 = vector.load %arg6[%c0_52, %c5, %c0_53, %c0_54] : memref<1x7x8x128xf32, #tpu.memory_space<vmem>>, vector<1x1x8x128xf32>
    %58 = vector.shape_cast %57 : vector<1x1x8x128xf32> to vector<8x128xf32>
    %59 = vector.shape_cast %14 : vector<8x128xf32> to vector<1x8x128xf32>
    %cst_55 = arith.constant dense<0.000000e+00> : vector<8x128xf32>
    %60 = vector.multi_reduction <add>, %59, %cst_55 [0] : vector<1x8x128xf32> to vector<8x128xf32>
    %61 = arith.addf %58, %60 : vector<8x128xf32>
    %c0_56 = arith.constant 0 : index
    %c5_57 = arith.constant 5 : index
    %c0_58 = arith.constant 0 : index
    %c0_59 = arith.constant 0 : index
    %62 = vector.load %arg6[%c0_56, %c5_57, %c0_58, %c0_59] : memref<1x7x8x128xf32, #tpu.memory_space<vmem>>, vector<1x1x8x128xf32>
    %63 = vector.shape_cast %62 : vector<1x1x8x128xf32> to vector<8x128xf32>
    %64 = vector.shape_cast %61 : vector<8x128xf32> to vector<1x1x8x128xf32>
    tpu.vector_store %arg6[%c0_56, %c5_57, %c0_58, %c0_59], %64 {strides = array<i32>} : memref<1x7x8x128xf32, #tpu.memory_space<vmem>>, vector<1x1x8x128xf32>,
    %c0_60 = arith.constant 0 : index
    %c6 = arith.constant 6 : index
    %c0_61 = arith.constant 0 : index
    %c0_62 = arith.constant 0 : index
    %65 = vector.load %arg6[%c0_60, %c6, %c0_61, %c0_62] : memref<1x7x8x128xf32, #tpu.memory_space<vmem>>, vector<1x1x8x128xf32>
    %66 = vector.shape_cast %65 : vector<1x1x8x128xf32> to vector<8x128xf32>
    %67 = vector.shape_cast %5 : vector<8x128xf32> to vector<1x8x128xf32>
    %cst_63 = arith.constant dense<0xFF800000> : vector<8x128xf32>
    %68 = vector.multi_reduction <maximumf>, %67, %cst_63 [0] : vector<1x8x128xf32> to vector<8x128xf32>
    %69 = arith.maximumf %66, %68 : vector<8x128xf32>
    %c0_64 = arith.constant 0 : index
    %c6_65 = arith.constant 6 : index
    %c0_66 = arith.constant 0 : index
    %c0_67 = arith.constant 0 : index
    %70 = vector.load %arg6[%c0_64, %c6_65, %c0_66, %c0_67] : memref<1x7x8x128xf32, #tpu.memory_space<vmem>>, vector<1x1x8x128xf32>
    %71 = vector.shape_cast %70 : vector<1x1x8x128xf32> to vector<8x128xf32>
    %72 = vector.shape_cast %69 : vector<8x128xf32> to vector<1x1x8x128xf32>
    tpu.vector_store %arg6[%c0_64, %c6_65, %c0_66, %c0_67], %72 {strides = array<i32>} : memref<1x7x8x128xf32, #tpu.memory_space<vmem>>, vector<1x1x8x128xf32>,
    return
  }
  func.func @transform_0(%arg0: i32, %arg1: i32) -> (i32, i32, i32) {
    %c0_i32 = arith.constant 0 : i32
    %c0_i32_0 = arith.constant 0 : i32
    return %arg0, %arg1, %c0_i32 : i32, i32, i32
  }
  func.func @transform_1(%arg0: i32, %arg1: i32) -> (i32, i32, i32) {
    %c0_i32 = arith.constant 0 : i32
    %c0_i32_0 = arith.constant 0 : i32
    return %arg0, %arg1, %c0_i32 : i32, i32, i32
  }
  func.func @transform_2(%arg0: i32, %arg1: i32) -> (i32, i32, i32) {
    %c0_i32 = arith.constant 0 : i32
    %c0_i32_0 = arith.constant 0 : i32
    return %arg0, %arg1, %c0_i32 : i32, i32, i32
  }
  func.func @transform_3(%arg0: i32, %arg1: i32) -> (i32, i32, i32) {
    %c0_i32 = arith.constant 0 : i32
    %c0_i32_0 = arith.constant 0 : i32
    return %arg0, %arg1, %c0_i32 : i32, i32, i32
  }
  func.func @transform_4(%arg0: i32, %arg1: i32) -> (i32, i32, i32, i32) {
    %c0_i32 = arith.constant 0 : i32
    %c0_i32_0 = arith.constant 0 : i32
    %c0_i32_1 = arith.constant 0 : i32
    %c0_i32_2 = arith.constant 0 : i32
    return %arg0, %c0_i32, %c0_i32_0, %c0_i32_1 : i32, i32, i32, i32
  }
}

</mosaic_0001>

<llo_original>
// kernel: tpu_custom_call.1
$region0: #{tpu_custom_call.1}
  #allocation0 [shape = 'u32[]', space=smem, size = 0x4, offset = 0x4, fixed_abs, tag = 'smem constant byte address 0x4 - core index']
  #allocation1 [shape = 'u32[144,128]{1,0:T(1,128)}', space=vmem, size = 0x12000, scoped, tag = 'internal scratch']
  %s0 = inlined_call_operand.hbm [shape: bf16[2,8,128], index: 0, kind: input, shape index: {}]
  %s1 = inlined_call_operand.hbm [shape: bf16[2,8,128], index: 1, kind: input, shape index: {}]
  %s2 = inlined_call_operand.hbm [shape: bf16[2,8,128], index: 2, kind: input, shape index: {}]
  %s3 = inlined_call_operand.hbm [shape: bf16[2,8,128], index: 3, kind: input, shape index: {}]
  %s4 = inlined_call_operand.hbm [shape: f32[2,7,8,128], index: 4, kind: output, shape index: {}]
  %s5 = sld [smem:[#allocation0]]
  $region69: #{tpu_custom_call.1} parent=0
    _
  %s7 = ssub.s32 1, %s5
  %s8 = scalar_select 0, %s7, %s5
  $region1: #{tpu_custom_call.1} parent=0
    #allocation2 [shape = 'u8[4096]{0}', space=vmem, size = 0x1000, scoped, tag = 'input window, operand 0']
    #allocation3 [shape = 's32[2]{0}', space=sflag, size = 0x8, scoped, tag = 'scoped memory for tpu_custom_call.1']
    #allocation4 [shape = 's32[2]{0}', space=sflag, size = 0x8, scoped, tag = 'scoped memory for tpu_custom_call.1']
    #allocation5 [shape = 'u8[4096]{0}', space=vmem, size = 0x1000, scoped, tag = 'input window, operand 1']
    #allocation6 [shape = 's32[2]{0}', space=sflag, size = 0x8, scoped, tag = 'scoped memory for tpu_custom_call.1']
    #allocation7 [shape = 'u8[4096]{0}', space=vmem, size = 0x1000, scoped, tag = 'input window, operand 2']
    #allocation8 [shape = 'u8[4096]{0}', space=vmem, size = 0x1000, scoped, tag = 'input window, operand 3']
    #allocation9 [shape = 's32[2]{0}', space=sflag, size = 0x8, scoped, tag = 'scoped memory for tpu_custom_call.1']
    #allocation10 [shape = 'u8[57344]{0}', space=vmem, size = 0xe000, scoped, tag = 'output window, operand 0']
    %9 = vsyncpa [#allocation3], 0
    %s10 = scalar_lea.sflag [#allocation3], 1
    %11 = vsyncpa %s10, 0
    %12 = vsyncpa [#allocation6], 0
    %s13 = scalar_lea.sflag [#allocation6], 1
    %14 = vsyncpa %s13, 0
    %15 = vsyncpa [#allocation9], 0
    %s16 = scalar_lea.sflag [#allocation9], 1
    %17 = vsyncpa %s16, 0
    %18 = vsyncpa [#allocation4], 0
    %s19 = scalar_lea.sflag [#allocation4], 1
    %20 = vsyncpa %s19, 0
    loop: start=0, step=1, limit=4
    $region2: #{tpu_custom_call.1} parent=1 // loop_pre_header
      _
    $region3: #{tpu_custom_call.1} parent=1 // loop_header
      %s22 = sphi 0, %s26
      %p23 = scmp.ge.s32.totalorder %s22, 4
      %s29 = sphi 0, %s41
      %s30 = sphi 0, %s37
      %s31 = sphi 0, %s29
      %s32 = sphi 0, %s30
      %s33 = sphi 0, %s31
      %s34 = sphi 0, %s32
      %s46 = sphi 0, %s48
      %s49 = sphi 0, %s46
      %s50 = sphi 0, %s49
      %s66 = sphi 0, %s50
      %s74 = sphi 0, %s76
      %s77 = sphi 0, %s74
      %s78 = sphi 0, %s77
      %s94 = sphi 0, %s78
      %s102 = sphi 0, %s104
      %s105 = sphi 0, %s102
      %s106 = sphi 0, %s105
      %s122 = sphi 0, %s106
      %s130 = sphi 0, %s132
      %s133 = sphi 0, %s130
      %s134 = sphi 0, %s133
      %s150 = sphi 0, %s134
      %s156 = sphi 0, %s158
      %s159 = sphi 0, %s156
      %s160 = sphi 0, %s159
      %s176 = sphi 0, %s160
    $region4: #{tpu_custom_call.1} parent=1 // loop_header_branch
      %25 = sbr.rel (%p23) target = $region8
    $region5: #{tpu_custom_call.1} parent=1 // loop_body
      %s27 = ssub.s32 %s22, 1
      %s28 = ssub.s32 %s22, 2
      %s35 = sadd.s32 1, %s30
      %p36 = scmp.ge.s32.totalorder %s35, 1
      %s37 = scalar_select %p36, 0, %s35
      %s38 = sadd.s32 1, %s29
      %s39 = scalar_select %p36, %s38, %s29
      %p40 = scmp.ge.s32.totalorder %s39, 2
      %s41 = scalar_select %p40, 0, %s39
      %s42 = ssub.s32 %s29, %s41
      %s43 = ssub.s32 %s30, %s37
      %s44 = sor.u32 %s42, %s43
      %p45 = scmp.eq.s32.totalorder %s44, 0
      %s47 = sadd.s32 %s46, 1
      %s48 = scalar_select %p45, %s46, %s47
      %p51 = pneg %p45
      %p52 = scmp.eq.s32.totalorder %s22, 1
      %p53 = por %p51, %p52
      %p54 = scmp.ne.s32.totalorder %s46, %s49
      %p55 = scmp.eq.s32.totalorder %s22, 0
      %p56 = por %p54, %p55
      %p57 = scmp.ne.s32.totalorder %s46, %s49
      %p58 = scmp.eq.s32.totalorder %s27, 1
      %p59 = por %p57, %p58
      %p60 = scmp.ne.s32.totalorder %s49, %s50
      %p61 = scmp.eq.s32.totalorder %s27, 0
      %p62 = por %p60, %p61
      %p63 = scmp.ne.s32.totalorder %s49, %s50
      %p64 = scmp.eq.s32.totalorder %s28, 1
      %p65 = por %p63, %p64
      %p67 = scmp.ne.s32.totalorder %s50, %s66
      %p68 = scmp.eq.s32.totalorder %s28, 0
      %p69 = por %p67, %p68
      %s70 = ssub.s32 %s29, %s41
      %s71 = ssub.s32 %s30, %s37
      %s72 = sor.u32 %s70, %s71
      %p73 = scmp.eq.s32.totalorder %s72, 0
      %s75 = sadd.s32 %s74, 1
      %s76 = scalar_select %p73, %s74, %s75
      %p79 = pneg %p73
      %p80 = scmp.eq.s32.totalorder %s22, 1
      %p81 = por %p79, %p80
      %p82 = scmp.ne.s32.totalorder %s74, %s77
      %p83 = scmp.eq.s32.totalorder %s22, 0
      %p84 = por %p82, %p83
      %p85 = scmp.ne.s32.totalorder %s74, %s77
      %p86 = scmp.eq.s32.totalorder %s27, 1
      %p87 = por %p85, %p86
      %p88 = scmp.ne.s32.totalorder %s77, %s78
      %p89 = scmp.eq.s32.totalorder %s27, 0
      %p90 = por %p88, %p89
      %p91 = scmp.ne.s32.totalorder %s77, %s78
      %p92 = scmp.eq.s32.totalorder %s28, 1
      %p93 = por %p91, %p92
      %p95 = scmp.ne.s32.totalorder %s78, %s94
      %p96 = scmp.eq.s32.totalorder %s28, 0
      %p97 = por %p95, %p96
      %s98 = ssub.s32 %s29, %s41
      %s99 = ssub.s32 %s30, %s37
      %s100 = sor.u32 %s98, %s99
      %p101 = scmp.eq.s32.totalorder %s100, 0
      %s103 = sadd.s32 %s102, 1
      %s104 = scalar_select %p101, %s102, %s103
      %p107 = pneg %p101
      %p108 = scmp.eq.s32.totalorder %s22, 1
      %p109 = por %p107, %p108
      %p110 = scmp.ne.s32.totalorder %s102, %s105
      %p111 = scmp.eq.s32.totalorder %s22, 0
      %p112 = por %p110, %p111
      %p113 = scmp.ne.s32.totalorder %s102, %s105
      %p114 = scmp.eq.s32.totalorder %s27, 1
      %p115 = por %p113, %p114
      %p116 = scmp.ne.s32.totalorder %s105, %s106
      %p117 = scmp.eq.s32.totalorder %s27, 0
      %p118 = por %p116, %p117
      %p119 = scmp.ne.s32.totalorder %s105, %s106
      %p120 = scmp.eq.s32.totalorder %s28, 1
      %p121 = por %p119, %p120
      %p123 = scmp.ne.s32.totalorder %s106, %s122
      %p124 = scmp.eq.s32.totalorder %s28, 0
      %p125 = por %p123, %p124
      %s126 = ssub.s32 %s29, %s41
      %s127 = ssub.s32 %s30, %s37
      %s128 = sor.u32 %s126, %s127
      %p129 = scmp.eq.s32.totalorder %s128, 0
      %s131 = sadd.s32 %s130, 1
      %s132 = scalar_select %p129, %s130, %s131
      %p135 = pneg %p129
      %p136 = scmp.eq.s32.totalorder %s22, 1
      %p137 = por %p135, %p136
      %p138 = scmp.ne.s32.totalorder %s130, %s133
      %p139 = scmp.eq.s32.totalorder %s22, 0
      %p140 = por %p138, %p139
      %p141 = scmp.ne.s32.totalorder %s130, %s133
      %p142 = scmp.eq.s32.totalorder %s27, 1
      %p143 = por %p141, %p142
      %p144 = scmp.ne.s32.totalorder %s133, %s134
      %p145 = scmp.eq.s32.totalorder %s27, 0
      %p146 = por %p144, %p145
      %p147 = scmp.ne.s32.totalorder %s133, %s134
      %p148 = scmp.eq.s32.totalorder %s28, 1
      %p149 = por %p147, %p148
      %p151 = scmp.ne.s32.totalorder %s134, %s150
      %p152 = scmp.eq.s32.totalorder %s28, 0
      %p153 = por %p151, %p152
      %s154 = ssub.s32 %s29, %s41
      %p155 = scmp.eq.s32.totalorder %s154, 0
      %s157 = sadd.s32 %s156, 1
      %s158 = scalar_select %p155, %s156, %s157
      %p161 = pneg %p155
      %p162 = scmp.eq.s32.totalorder %s22, 1
      %p163 = por %p161, %p162
      %p164 = scmp.ne.s32.totalorder %s156, %s159
      %p165 = scmp.eq.s32.totalorder %s22, 0
      %p166 = por %p164, %p165
      %p167 = scmp.ne.s32.totalorder %s156, %s159
      %p168 = scmp.eq.s32.totalorder %s27, 1
      %p169 = por %p167, %p168
      %p170 = scmp.ne.s32.totalorder %s159, %s160
      %p171 = scmp.eq.s32.totalorder %s27, 0
      %p172 = por %p170, %p171
      %p173 = scmp.ne.s32.totalorder %s159, %s160
      %p174 = scmp.eq.s32.totalorder %s28, 1
      %p175 = por %p173, %p174
      %p177 = scmp.ne.s32.totalorder %s160, %s176
      %p178 = scmp.eq.s32.totalorder %s28, 0
      %p179 = por %p177, %p178
      %p180 = scmp.le.s32.totalorder 1, %s22
      %p181 = scmp.lt.s32.totalorder %s22, 3
      %p182 = pnand %p180, %p181
      %p183 = pneg %p182
      // Predicated region
      $region9: #{tpu_custom_call.1} parent=5 // pred_check
        _
      $region10: #{tpu_custom_call.1} parent=5 // pred_check_branch
        %185 = sbr.rel (%p182) target = $region12
      $region11: #{tpu_custom_call.1} parent=5 // pred_region
        %s186 = ssub.s32 %s22, 1
      $region12: #{tpu_custom_call.1} parent=5 // pred_fallthru
        _
      %p187 = scmp.lt.s32.totalorder %s22, 2
      // Predicated region
      $region13: #{tpu_custom_call.1} parent=5 // pred_check
        %p188 = pneg %p187
      $region14: #{tpu_custom_call.1} parent=5 // pred_check_branch
        %190 = sbr.rel (%p188) target = $region16
      $region15: #{tpu_custom_call.1} parent=5 // pred_region
        // Predicated region
        $region17: #{tpu_custom_call.1} parent=15 // pred_check
          %p191 = pneg %p56
        $region18: #{tpu_custom_call.1} parent=15 // pred_check_branch
          %193 = sbr.rel (%p191) target = $region20
        $region19: #{tpu_custom_call.1} parent=15 // pred_region
          %s194 = sand.u32 %s46, 1
          %s195 = scalar_lea.sflag [#allocation3], %s194
          %s196 = sand.u32 %s46, 1
          %s197 = smul.addr %s196, 4
          %s198 = scalar_lea.vmem [#allocation2], %s197
          %s200 = ssub.s32 64, 64
          %201 = vsyncadd %s195, %s200
          %s202 = sadd.s32 %s30, %s29
          %s203 = smul.addr %s202, 64
          %s204 = scalar_lea.hbm %s0, %s203
          %s206 = sshll.u32 %s198, 4
          %s207 = int_to_ptr.vmem [resolvable:$true] %s206
          %209 = dma.hbm_to_vmem [thread:$0]  %s204, 64, %s207, %s195
        $region20: #{tpu_custom_call.1} parent=15 // pred_fallthru
          _
        // Predicated region
        $region21: #{tpu_custom_call.1} parent=15 // pred_check
          %p210 = pneg %p84
        $region22: #{tpu_custom_call.1} parent=15 // pred_check_branch
          %212 = sbr.rel (%p210) target = $region24
        $region23: #{tpu_custom_call.1} parent=15 // pred_region
          %s213 = sand.u32 %s22, 1
          %s214 = scalar_lea.sflag [#allocation6], %s213
          %s215 = sand.u32 %s74, 1
          %s216 = smul.addr %s215, 4
          %s217 = scalar_lea.vmem [#allocation5], %s216
          %s219 = ssub.s32 64, 64
          %220 = vsyncadd %s214, %s219
          %s221 = sadd.s32 %s30, %s29
          %s222 = smul.addr %s221, 64
          %s223 = scalar_lea.hbm %s1, %s222
          %s225 = sshll.u32 %s217, 4
          %s226 = int_to_ptr.vmem [resolvable:$true] %s225
          %228 = dma.hbm_to_vmem [thread:$0]  %s223, 64, %s226, %s214
        $region24: #{tpu_custom_call.1} parent=15 // pred_fallthru
          _
        // Predicated region
        $region25: #{tpu_custom_call.1} parent=15 // pred_check
          %p229 = pneg %p112
        $region26: #{tpu_custom_call.1} parent=15 // pred_check_branch
          %231 = sbr.rel (%p229) target = $region28
        $region27: #{tpu_custom_call.1} parent=15 // pred_region
          %s232 = sand.u32 %s22, 1
          %s233 = scalar_lea.sflag [#allocation6], %s232
          %s234 = sand.u32 %s102, 1
          %s235 = smul.addr %s234, 4
          %s236 = scalar_lea.vmem [#allocation7], %s235
          %s238 = ssub.s32 64, 64
          %239 = vsyncadd %s233, %s238
          %s240 = sadd.s32 %s30, %s29
          %s241 = smul.addr %s240, 64
          %s242 = scalar_lea.hbm %s2, %s241
          %s244 = sshll.u32 %s236, 4
          %s245 = int_to_ptr.vmem [resolvable:$true] %s244
          %247 = dma.hbm_to_vmem [thread:$0]  %s242, 64, %s245, %s233
        $region28: #{tpu_custom_call.1} parent=15 // pred_fallthru
          _
        // Predicated region
        $region29: #{tpu_custom_call.1} parent=15 // pred_check
          %p248 = pneg %p140
        $region30: #{tpu_custom_call.1} parent=15 // pred_check_branch
          %250 = sbr.rel (%p248) target = $region32
        $region31: #{tpu_custom_call.1} parent=15 // pred_region
          %s251 = sand.u32 %s130, 1
          %s252 = scalar_lea.sflag [#allocation9], %s251
          %s253 = sand.u32 %s130, 1
          %s254 = smul.addr %s253, 4
          %s255 = scalar_lea.vmem [#allocation8], %s254
          %s257 = ssub.s32 64, 64
          %258 = vsyncadd %s252, %s257
          %s259 = sadd.s32 %s30, %s29
          %s260 = smul.addr %s259, 64
          %s261 = scalar_lea.hbm %s3, %s260
          %s263 = sshll.u32 %s255, 4
          %s264 = int_to_ptr.vmem [resolvable:$true] %s263
          %266 = dma.hbm_to_vmem [thread:$0]  %s261, 64, %s264, %s252
        $region32: #{tpu_custom_call.1} parent=15 // pred_fallthru
          _
      $region16: #{tpu_custom_call.1} parent=5 // pred_fallthru
        _
      %p267 = scmp.le.s32.totalorder 1, %s22
      %p268 = scmp.lt.s32.totalorder %s22, 3
      %p269 = pnand %p267, %p268
      %p270 = pneg %p269
      // Predicated region
      $region33: #{tpu_custom_call.1} parent=5 // pred_check
        _
      $region34: #{tpu_custom_call.1} parent=5 // pred_check_branch
        %272 = sbr.rel (%p269) target = $region36
      $region35: #{tpu_custom_call.1} parent=5 // pred_region
        %s273 = ssub.s32 %s22, 1
        %s274 = sand.u32 %s49, 1
        %s275 = scalar_lea.sflag [#allocation3], %s274
        %s276 = sand.u32 %s49, 1
        %s277 = smul.addr %s276, 4
        %s278 = scalar_lea.vmem [#allocation2], %s277
        // Predicated region
        $region37: #{tpu_custom_call.1} parent=35 // pred_check
          %p279 = pneg %p62
        $region38: #{tpu_custom_call.1} parent=35 // pred_check_branch
          %281 = sbr.rel (%p279) target = $region40
        $region39: #{tpu_custom_call.1} parent=35 // pred_region
          %282 = dma.done %s275, 64
        $region40: #{tpu_custom_call.1} parent=35 // pred_fallthru
          _
        %s283 = sand.u32 %s27, 1
        %s284 = scalar_lea.sflag [#allocation6], %s283
        %s285 = sand.u32 %s77, 1
        %s286 = smul.addr %s285, 4
        %s287 = scalar_lea.vmem [#allocation5], %s286
        // Predicated region
        $region41: #{tpu_custom_call.1} parent=35 // pred_check
          %p288 = pneg %p90
        $region42: #{tpu_custom_call.1} parent=35 // pred_check_branch
          %290 = sbr.rel (%p288) target = $region44
        $region43: #{tpu_custom_call.1} parent=35 // pred_region
          %291 = dma.done %s284, 64
        $region44: #{tpu_custom_call.1} parent=35 // pred_fallthru
          _
        %s292 = sand.u32 %s27, 1
        %s293 = scalar_lea.sflag [#allocation6], %s292
        %s294 = sand.u32 %s105, 1
        %s295 = smul.addr %s294, 4
        %s296 = scalar_lea.vmem [#allocation7], %s295
        // Predicated region
        $region45: #{tpu_custom_call.1} parent=35 // pred_check
          %p297 = pneg %p118
        $region46: #{tpu_custom_call.1} parent=35 // pred_check_branch
          %299 = sbr.rel (%p297) target = $region48
        $region47: #{tpu_custom_call.1} parent=35 // pred_region
          %300 = dma.done %s293, 64
        $region48: #{tpu_custom_call.1} parent=35 // pred_fallthru
          _
        %s301 = sand.u32 %s133, 1
        %s302 = scalar_lea.sflag [#allocation9], %s301
        %s303 = sand.u32 %s133, 1
        %s304 = smul.addr %s303, 4
        %s305 = scalar_lea.vmem [#allocation8], %s304
        // Predicated region
        $region49: #{tpu_custom_call.1} parent=35 // pred_check
          %p306 = pneg %p146
        $region50: #{tpu_custom_call.1} parent=35 // pred_check_branch
          %308 = sbr.rel (%p306) target = $region52
        $region51: #{tpu_custom_call.1} parent=35 // pred_region
          %309 = dma.done %s302, 64
        $region52: #{tpu_custom_call.1} parent=35 // pred_fallthru
          _
        %s310 = sand.u32 %s49, 1
        %s311 = scalar_lea.sflag [#allocation3], %s310
        %s312 = sand.u32 %s49, 1
        %s313 = smul.addr %s312, 4
        %s314 = scalar_lea.vmem [#allocation2], %s313
        %p315 = pneg %p62
        %p316 = pneg %p59
        %s317 = sand.u32 %s27, 1
        %s318 = scalar_lea.sflag [#allocation6], %s317
        %s319 = sand.u32 %s77, 1
        %s320 = smul.addr %s319, 4
        %s321 = scalar_lea.vmem [#allocation5], %s320
        %p322 = pneg %p90
        %p323 = pneg %p87
        %s324 = sand.u32 %s27, 1
        %s325 = scalar_lea.sflag [#allocation6], %s324
        %s326 = sand.u32 %s105, 1
        %s327 = smul.addr %s326, 4
        %s328 = scalar_lea.vmem [#allocation7], %s327
        %p329 = pneg %p118
        %p330 = pneg %p115
        %s331 = sand.u32 %s133, 1
        %s332 = scalar_lea.sflag [#allocation9], %s331
        %s333 = sand.u32 %s133, 1
        %s334 = smul.addr %s333, 4
        %s335 = scalar_lea.vmem [#allocation8], %s334
        %p336 = pneg %p146
        %p337 = pneg %p143
        %p338 = pneg %p172
        %p339 = pneg %p169
        %s340 = sand.u32 %s159, 1
        %s341 = scalar_lea.sflag [#allocation4], %s340
        %s342 = sand.u32 %s159, 1
        %s343 = smul.addr %s342, 56
        %s344 = scalar_lea.vmem [#allocation10], %s343
        %p345 = scmp.eq.s32.totalorder %s32, 0
        // Predicated region
        $region53: #{tpu_custom_call.1} parent=35 // pred_check
          %p346 = pneg %p345
        $region54: #{tpu_custom_call.1} parent=35 // pred_check_branch
          %348 = sbr.rel (%p346) target = $region56
        $region55: #{tpu_custom_call.1} parent=35 // pred_region
          %349 = vst [vmem:[%s344] sm:$0xff] 0.0
          %350 = vst [vmem:[%s344 + $0x8] sm:$0xff] 0.0
          %351 = vst [vmem:[%s344 + $0x10] sm:$0xff] 0.0
          %352 = vst [vmem:[%s344 + $0x18] sm:$0xff] 0.0
          %353 = vst [vmem:[%s344 + $0x20] sm:$0xff] 0.0
          %354 = vst [vmem:[%s344 + $0x28] sm:$0xff] 0.0
          %355 = vst [vmem:[%s344 + $0x30] sm:$0xff] 0.0
          %s356 = scalar_lea.vmem %s344, 48 [#allocation10]
          %357 = vst [vmem:[%s356] sm:$0xff] -inf
        $region56: #{tpu_custom_call.1} parent=35 // pred_fallthru
          _
        %v358 = vld [vmem:[%s278] sm:$0xf]
        %v359 = vunpack.c.l.bf16 %v358
        %v360 = vld [vmem:[%s287] sm:$0xf]
        %v361 = vunpack.c.l.bf16 %v360
        %v362 = vld [vmem:[%s296] sm:$0xf]
        %v363 = vunpack.c.l.bf16 %v362
        %v364 = vld [vmem:[%s305] sm:$0xf]
        %v365 = vunpack.c.l.bf16 %v364
        %v366 = vld [vmem:[%s344] sm:$0xff]
        %v367 = vmul.f32 %v359, %v363
        %v368 = vadd.f32 %v367, 0.0
        %v369 = vadd.f32 %v366, %v368
        %370 = vst [vmem:[%s344] sm:$0xff] %v369
        %s371 = scalar_lea.vmem %s344, 8 [#allocation10]
        %v372 = vld [vmem:[%s371] sm:$0xff]
        %v373 = vadd.f32 %v359, 0.0
        %v374 = vadd.f32 %v372, %v373
        %375 = vst [vmem:[%s371] sm:$0xff] %v374
        %s376 = scalar_lea.vmem %s344, 16 [#allocation10]
        %v377 = vld [vmem:[%s376] sm:$0xff]
        %v378 = vadd.f32 %v363, 0.0
        %v379 = vadd.f32 %v377, %v378
        %380 = vst [vmem:[%s376] sm:$0xff] %v379
        %s381 = scalar_lea.vmem %s344, 24 [#allocation10]
        %v382 = vld [vmem:[%s381] sm:$0xff]
        %v383 = vmul.f32 %v361, %v365
        %v384 = vadd.f32 %v383, 0.0
        %v385 = vadd.f32 %v382, %v384
        %386 = vst [vmem:[%s381] sm:$0xff] %v385
        %s387 = scalar_lea.vmem %s344, 32 [#allocation10]
        %v388 = vld [vmem:[%s387] sm:$0xff]
        %v389 = vadd.f32 %v361, 0.0
        %v390 = vadd.f32 %v388, %v389
        %391 = vst [vmem:[%s387] sm:$0xff] %v390
        %s392 = scalar_lea.vmem %s344, 40 [#allocation10]
        %v393 = vld [vmem:[%s392] sm:$0xff]
        %v394 = vadd.f32 %v365, 0.0
        %v395 = vadd.f32 %v393, %v394
        %396 = vst [vmem:[%s392] sm:$0xff] %v395
        %s397 = scalar_lea.vmem %s344, 48 [#allocation10]
        %v398 = vld [vmem:[%s397] sm:$0xff]
        %v399 = vmax.f32 %v398, %v359
        %400 = vst [vmem:[%s397] sm:$0xff] %v399
        %s401 = sand.u32 %s159, 1
        %s402 = scalar_lea.sflag [#allocation4], %s401
        %s403 = sand.u32 %s159, 1
        %s404 = smul.addr %s403, 56
        %s405 = scalar_lea.vmem [#allocation10], %s404
        // Predicated region
        $region57: #{tpu_custom_call.1} parent=35 // pred_check
          %p406 = pneg %p169
        $region58: #{tpu_custom_call.1} parent=35 // pred_check_branch
          %408 = sbr.rel (%p406) target = $region60
        $region59: #{tpu_custom_call.1} parent=35 // pred_region
          %s410 = ssub.s32 896, 896
          %411 = vsyncadd %s402, %s410
          %s412 = smul.addr %s31, 7
          %s413 = smul.addr %s412, 128
          %s414 = scalar_lea.hbm %s4, %s413
          %s415 = sshll.u32 %s405, 4
          %s416 = int_to_ptr.vmem [resolvable:$true] %s415
          %421 = dma.vmem_to_hbm [thread:$0]  %s416, 896, %s414, %s402, 128, 128, 8
        $region60: #{tpu_custom_call.1} parent=35 // pred_fallthru
          _
      $region36: #{tpu_custom_call.1} parent=5 // pred_fallthru
        _
      %p422 = scmp.le.s32.totalorder 2, %s22
      // Predicated region
      $region61: #{tpu_custom_call.1} parent=5 // pred_check
        %p423 = pneg %p422
      $region62: #{tpu_custom_call.1} parent=5 // pred_check_branch
        %425 = sbr.rel (%p423) target = $region64
      $region63: #{tpu_custom_call.1} parent=5 // pred_region
        %s426 = ssub.s32 %s22, 2
        // Predicated region
        $region65: #{tpu_custom_call.1} parent=63 // pred_check
          %p427 = pneg %p175
        $region66: #{tpu_custom_call.1} parent=63 // pred_check_branch
          %429 = sbr.rel (%p427) target = $region68
        $region67: #{tpu_custom_call.1} parent=63 // pred_region
          %s430 = sand.u32 %s160, 1
          %s431 = scalar_lea.sflag [#allocation4], %s430
          %s432 = sand.u32 %s160, 1
          %s433 = smul.addr %s432, 56
          %s434 = scalar_lea.vmem [#allocation10], %s433
          %435 = dma.done %s431, 896
        $region68: #{tpu_custom_call.1} parent=63 // pred_fallthru
          _
      $region64: #{tpu_custom_call.1} parent=5 // pred_fallthru
        _
    $region6: #{tpu_custom_call.1} parent=1 // loop_footer
      %s26 = sadd.s32 1, %s22
    $region7: #{tpu_custom_call.1} parent=1 // loop_footer_branch
      %21 = sbr.rel target = $region3
    $region8: #{tpu_custom_call.1} parent=1 // loop_exit
      _
    %436 = vsyncpa [#allocation3], 1
    %s437 = scalar_lea.sflag [#allocation3], 1
    %438 = vsyncpa %s437, 1
    %439 = vsyncpa [#allocation6], 1
    %s440 = scalar_lea.sflag [#allocation6], 1
    %441 = vsyncpa %s440, 1
    %442 = vsyncpa [#allocation9], 1
    %s443 = scalar_lea.sflag [#allocation9], 1
    %444 = vsyncpa %s443, 1
    %445 = vsyncpa [#allocation4], 1
    %s446 = scalar_lea.sflag [#allocation4], 1
    %447 = vsyncpa %s446, 1

</llo_original>
